<compile_context>
chip_gen: v7x
topology: tpu7x:2x2x1
jax: 0.10.0
libtpu: 0.0.40
codegen_flags: <defaults>
</compile_context>

<pallas_src>
import functools

import jax
import jax.numpy as jnp
from jax.experimental import pallas as pl
from jax.experimental.pallas import tpu as pltpu

HIDDEN = 64  # matches `hidden_size = 64` in the PyTorch module


def _adapter_kernel(x_ref, w1_ref, w2_ref, w3_ref, o_ref):
    """One (B_TILE, C, T_TILE) block: 3x (W @ h, ReLU) + residual, T on lanes."""
    w_dt = w1_ref.dtype                                   # MXU operand dtype
    b_tile = x_ref.shape[0]
    for b in range(b_tile):                               # static unroll (b_tile is small)
        x = x_ref[b]                                      # (C, Tt), input dtype
        # Layer 1 — cast activation to the weight dtype (same policy as layers
        # 2/3) so bf16 params hit the fast bf16 MXU path instead of f32.
        h = jnp.dot(w1_ref[...], x.astype(w_dt),
                    preferred_element_type=jnp.float32)   # (H, Tt), f32 acc
        h = jnp.maximum(h, 0.0)
        h = jnp.dot(w2_ref[...], h.astype(w_dt),
                    preferred_element_type=jnp.float32)   # (H, Tt)
        h = jnp.maximum(h, 0.0)
        h = jnp.dot(w3_ref[...], h.astype(w_dt),
                    preferred_element_type=jnp.float32)   # (C, Tt)
        h = jnp.maximum(h, 0.0)
        o_ref[b] = (h + x.astype(jnp.float32)).astype(o_ref.dtype)   # residual


def _pick_tiles(B, C, T, itemsize):
    """Pick (B_TILE, T_TILE): lane-dense T tile (multiple of 128), ~4 MiB x block."""
    budget = 4 << 20                                  # ~4 MiB per x block
    if T <= 128:
        tt = T                                        # full T dim (allowed even if <128)
    else:
        t_cap = pl.cdiv(T, 128) * 128                 # never wider than padded T
        tt = (budget // max(C * itemsize, 1)) // 128 * 128
        tt = max(128, min(tt, t_cap))
        if B == 1:
            # Guarantee >=2 grid steps so both v7x TensorCores get work.
            half = pl.cdiv(pl.cdiv(T, 2), 128) * 128
            tt = min(tt, max(128, half))
    n_t = pl.cdiv(T, tt)

    b_tile = 1
    if n_t == 1 and B > 1:
        # Short sequences: pack several batch rows per grid step to amortize
        # per-step overhead, but keep >=2 grid steps and bounded unrolling.
        per_b = max(C * tt * itemsize, 1)
        b_tile = int(max(1, min(budget // per_b, pl.cdiv(B, 2), 8)))
    return b_tile, int(tt)


@jax.jit
def feature_adapter(x_nct, w1, w2, w3):
    """x_nct: (B, C, T).  Weights in PyTorch (out, in) layout:
    w1: (H, C), w2: (H, H), w3: (C, H)."""
    B, C, T = x_nct.shape
    H = w1.shape[0]
    assert w1.shape == (H, C) and w2.shape == (H, H) and w3.shape == (C, H), \
        "weights must be (out, in) and output_size == input_size (residual add)"

    itemsize = jnp.dtype(x_nct.dtype).itemsize
    w_itemsize = jnp.dtype(w1.dtype).itemsize
    b_tile, tt = _pick_tiles(B, C, T, itemsize)
    n_b = pl.cdiv(B, b_tile)
    n_t = pl.cdiv(T, tt)

    # Advisory cost for XLA's scheduler.
    flops = 2 * B * T * (C * H + H * H + H * C)
    bytes_accessed = int(2 * B * C * T * itemsize + (C * H + H * H + C * H) * w_itemsize)
    cost = pl.CostEstimate(flops=flops, transcendentals=0,
                           bytes_accessed=bytes_accessed)

    # Explicit VMEM budget: 2x in-blocks + 2x out-blocks + resident weights +
    # f32 intermediates; clamp to <=48 MiB so it also fits v7x (64 MiB VMEM).
    blk_bytes = b_tile * C * tt * itemsize
    w_bytes = (H * C + H * H + C * H) * w_itemsize
    interm_bytes = (3 * H + 2 * C) * tt * 4
    vmem_limit = int(min(max(2 * (4 * blk_bytes + 2 * w_bytes + interm_bytes),
                             32 << 20), 48 << 20))

    out = pl.pallas_call(
        _adapter_kernel,
        out_shape=jax.ShapeDtypeStruct((B, C, T), x_nct.dtype),
        grid_spec=pltpu.PrefetchScalarGridSpec(
            num_scalar_prefetch=0,
            grid=(n_b, n_t),
            in_specs=[
                pl.BlockSpec((b_tile, C, tt), lambda b, t: (b, 0, t)),  # x, native NCT
                pl.BlockSpec((H, C), lambda b, t: (0, 0)),              # W1 (resident)
                pl.BlockSpec((H, H), lambda b, t: (0, 0)),              # W2 (resident)
                pl.BlockSpec((C, H), lambda b, t: (0, 0)),              # W3 (resident)
            ],
            out_specs=pl.BlockSpec((b_tile, C, tt), lambda b, t: (b, 0, t)),
        ),
        compiler_params=pltpu.CompilerParams(
            dimension_semantics=("parallel", "parallel"),
            vmem_limit_bytes=vmem_limit,
        ),
        cost_estimate=cost,
    )(x_nct, w1, w2, w3)
    return out


def init_params(key, input_size, output_size, hidden_size=HIDDEN,
                dtype=jnp.float32):
    """Mirror nn.init.normal_(std=0.01); PyTorch (out, in) weight layout."""
    k1, k2, k3 = jax.random.split(key, 3)
    w1 = (0.01 * jax.random.normal(k1, (hidden_size, input_size))).astype(dtype)
    w2 = (0.01 * jax.random.normal(k2, (hidden_size, hidden_size))).astype(dtype)
    w3 = (0.01 * jax.random.normal(k3, (output_size, hidden_size))).astype(dtype)
    return w1, w2, w3


def _reference(x_nct, w1, w2, w3):
    """Pure-JAX reference of the PyTorch forward (PyTorch weight layout)."""
    x = jnp.transpose(x_nct, (0, 2, 1)).astype(jnp.float32)     # (B, T, C)
    residual = x
    x = jax.nn.relu(x @ w1.T.astype(jnp.float32))
    x = jax.nn.relu(x @ w2.T.astype(jnp.float32))
    x = jax.nn.relu(x @ w3.T.astype(jnp.float32))
    x = x + residual
    return jnp.transpose(x, (0, 2, 1)).astype(x_nct.dtype)      # (B, C, T)


# TODO(synk): the use_cnn=True branch (three Conv1d, kernel_size=3, padding=1)
# and check_weight_update() (training-time bookkeeping) are not kernelized;
# only the default bias-free Linear forward path is implemented here.

if __name__ == "__main__":
    key = jax.random.PRNGKey(0)
    kx, kp, kx2 = jax.random.split(key, 3)

    # Lane-dense case: T is a multiple of 128.
    B, C, T = 2, 32, 256          # input_size == output_size == C (residual add)
    x = jax.random.normal(kx, (B, C, T), dtype=jnp.float32)
    w1, w2, w3 = init_params(kp, input_size=C, output_size=C)

    y = jax.block_until_ready(feature_adapter(x, w1, w2, w3))
    y_ref = _reference(x, w1, w2, w3)
    assert y.shape == (B, C, T)
    assert jnp.allclose(y, y_ref, atol=1e-4, rtol=1e-4), "mismatch vs reference"

    # Ragged T: exercises the in-kernel boundary masking (no wrapper pad/slice).
    x2 = jax.random.normal(kx2, (B, C, 200), dtype=jnp.float32)
    y2 = jax.block_until_ready(feature_adapter(x2, w1, w2, w3))
    y2_ref = _reference(x2, w1, w2, w3)
    assert y2.shape == (B, C, 200)
    assert jnp.allclose(y2, y2_ref, atol=1e-4, rtol=1e-4), "mismatch vs ref (ragged T)"

    # bf16 end-to-end (fast MXU path / halved HBM bytes); looser tolerance.
    xb = x.astype(jnp.bfloat16)
    wb = tuple(w.astype(jnp.bfloat16) for w in (w1, w2, w3))
    yb = jax.block_until_ready(feature_adapter(xb, *wb))
    yb_ref = _reference(xb, *wb)
    assert yb.shape == (B, C, T)
    assert jnp.allclose(yb.astype(jnp.float32), yb_ref.astype(jnp.float32),
                        atol=5e-2, rtol=5e-2), "mismatch vs reference (bf16)"

    print("KERNEL_OK")
</pallas_src>

<mosaic_0001>
module attributes {stable_mosaic.version = 11 : i64} {
  func.func @_adapter_kernel(%arg0: i32, %arg1: i32, %arg2: memref<1x32x256xf32, #tpu.memory_space<vmem>>, %arg3: memref<64x32xf32, #tpu.memory_space<vmem>>, %arg4: memref<64x64xf32, #tpu.memory_space<vmem>>, %arg5: memref<32x64xf32, #tpu.memory_space<vmem>>, %arg6: memref<1x32x256xf32, #tpu.memory_space<vmem>>) attributes {dimension_semantics = [#tpu.dimension_semantics<parallel>, #tpu.dimension_semantics<parallel>], iteration_bounds = array<i64: 2, 1>, scalar_prefetch = 0 : i64, scratch_operands = 0 : i64, tpu.core_type = #tpu.core_type<tc>, window_params = [{transform_indices = @transform_0, window_bounds = array<i64: 1, 32, 256>}, {pipeline_mode = #tpu.pipeline_mode<synchronous>, transform_indices = @transform_1, window_bounds = array<i64: 64, 32>}, {pipeline_mode = #tpu.pipeline_mode<synchronous>, transform_indices = @transform_2, window_bounds = array<i64: 64, 64>}, {pipeline_mode = #tpu.pipeline_mode<synchronous>, transform_indices = @transform_3, window_bounds = array<i64: 32, 64>}, {transform_indices = @transform_4, window_bounds = array<i64: 1, 32, 256>}]} {
    %c0 = arith.constant 0 : index
    %c0_0 = arith.constant 0 : index
    %c0_1 = arith.constant 0 : index
    %0 = vector.load %arg2[%c0, %c0_0, %c0_1] : memref<1x32x256xf32, #tpu.memory_space<vmem>>, vector<1x32x256xf32>
    %1 = vector.shape_cast %0 : vector<1x32x256xf32> to vector<32x256xf32>
    %c0_2 = arith.constant 0 : index
    %c0_3 = arith.constant 0 : index
    %2 = vector.load %arg3[%c0_2, %c0_3] : memref<64x32xf32, #tpu.memory_space<vmem>>, vector<64x32xf32>
    %cst = arith.constant dense<0.000000e+00> : vector<64x256xf32>
    %3 = tpu.matmul %2, %1, %cst {dimension_numbers = #tpu.dot_dimension_numbers<[1], [0], [0], [1], [0, 0, 1, 1], [], []>} : vector<64x32xf32>, vector<32x256xf32>, vector<64x256xf32> -> vector<64x256xf32>
    %cst_4 = arith.constant 0.000000e+00 : f32
    %4 = vector.broadcast %cst_4 : f32 to vector<64x256xf32>
    %5 = arith.maximumf %3, %4 : vector<64x256xf32>
    %c0_5 = arith.constant 0 : index
    %c0_6 = arith.constant 0 : index
    %6 = vector.load %arg4[%c0_5, %c0_6] : memref<64x64xf32, #tpu.memory_space<vmem>>, vector<64x64xf32>
    %cst_7 = arith.constant dense<0.000000e+00> : vector<64x256xf32>
    %7 = tpu.matmul %6, %5, %cst_7 {dimension_numbers = #tpu.dot_dimension_numbers<[1], [0], [0], [1], [0, 0, 1, 1], [], []>} : vector<64x64xf32>, vector<64x256xf32>, vector<64x256xf32> -> vector<64x256xf32>
    %cst_8 = arith.constant 0.000000e+00 : f32
    %8 = vector.broadcast %cst_8 : f32 to vector<64x256xf32>
    %9 = arith.maximumf %7, %8 : vector<64x256xf32>
    %c0_9 = arith.constant 0 : index
    %c0_10 = arith.constant 0 : index
    %10 = vector.load %arg5[%c0_9, %c0_10] : memref<32x64xf32, #tpu.memory_space<vmem>>, vector<32x64xf32>
    %cst_11 = arith.constant dense<0.000000e+00> : vector<32x256xf32>
    %11 = tpu.matmul %10, %9, %cst_11 {dimension_numbers = #tpu.dot_dimension_numbers<[1], [0], [0], [1], [0, 0, 1, 1], [], []>} : vector<32x64xf32>, vector<64x256xf32>, vector<32x256xf32> -> vector<32x256xf32>
    %cst_12 = arith.constant 0.000000e+00 : f32
    %12 = vector.broadcast %cst_12 : f32 to vector<32x256xf32>
    %13 = arith.maximumf %11, %12 : vector<32x256xf32>
    %14 = arith.addf %13, %1 : vector<32x256xf32>
    %c0_13 = arith.constant 0 : index
    %c0_14 = arith.constant 0 : index
    %c0_15 = arith.constant 0 : index
    %15 = vector.load %arg6[%c0_13, %c0_14, %c0_15] : memref<1x32x256xf32, #tpu.memory_space<vmem>>, vector<1x32x256xf32>
    %16 = vector.shape_cast %15 : vector<1x32x256xf32> to vector<32x256xf32>
    %17 = vector.shape_cast %14 : vector<32x256xf32> to vector<1x32x256xf32>
    tpu.vector_store %arg6[%c0_13, %c0_14, %c0_15], %17 {strides = array<i32>} : memref<1x32x256xf32, #tpu.memory_space<vmem>>, vector<1x32x256xf32>,
    return
  }
  func.func @transform_0(%arg0: i32, %arg1: i32) -> (i32, i32, i32) {
    %c0_i32 = arith.constant 0 : i32
    %c0_i32_0 = arith.constant 0 : i32
    return %arg0, %c0_i32, %arg1 : i32, i32, i32
  }
  func.func @transform_1(%arg0: i32, %arg1: i32) -> (i32, i32) {
    %c0_i32 = arith.constant 0 : i32
    %c0_i32_0 = arith.constant 0 : i32
    %c0_i32_1 = arith.constant 0 : i32
    return %c0_i32, %c0_i32_0 : i32, i32
  }
  func.func @transform_2(%arg0: i32, %arg1: i32) -> (i32, i32) {
    %c0_i32 = arith.constant 0 : i32
    %c0_i32_0 = arith.constant 0 : i32
    %c0_i32_1 = arith.constant 0 : i32
    return %c0_i32, %c0_i32_0 : i32, i32
  }
  func.func @transform_3(%arg0: i32, %arg1: i32) -> (i32, i32) {
    %c0_i32 = arith.constant 0 : i32
    %c0_i32_0 = arith.constant 0 : i32
    %c0_i32_1 = arith.constant 0 : i32
    return %c0_i32, %c0_i32_0 : i32, i32
  }
  func.func @transform_4(%arg0: i32, %arg1: i32) -> (i32, i32, i32) {
    %c0_i32 = arith.constant 0 : i32
    %c0_i32_0 = arith.constant 0 : i32
    return %arg0, %c0_i32, %arg1 : i32, i32, i32
  }
}

</mosaic_0001>

<llo_original>
// kernel: feature_adapter.1
$region0: #{feature_adapter.1}
  #allocation0 [shape = 'u32[]', space=smem, size = 0x4, offset = 0x4, fixed_abs, tag = 'smem constant byte address 0x4 - core index']
  #allocation1 [shape = 'u32[144,128]{1,0:T(1,128)}', space=vmem, size = 0x12000, scoped, tag = 'internal scratch']
  %s0 = inlined_call_operand.hbm [shape: f32[2,32,256], index: 0, kind: input, shape index: {}]
  %s1 = inlined_call_operand.vmem [shape: f32[64,32], index: 1, kind: input, shape index: {}]
  %s2 = inlined_call_operand.vmem [shape: f32[64,64], index: 2, kind: input, shape index: {}]
  %s3 = inlined_call_operand.vmem [shape: f32[32,64], index: 3, kind: input, shape index: {}]
  %s4 = inlined_call_operand.hbm [shape: f32[2,32,256], index: 4, kind: output, shape index: {}]
  %s5 = sld [smem:[#allocation0]]
  $region53: #{feature_adapter.1} parent=0
    _
  %s7 = ssub.s32 1, %s5
  %s8 = scalar_select 0, %s7, %s5
  $region1: #{feature_adapter.1} parent=0
    #allocation2 [shape = 'u8[65536]{0}', space=vmem, size = 0x10000, scoped, tag = 'input window, operand 0']
    #allocation3 [shape = 's32[2]{0}', space=sflag, size = 0x8, scoped, tag = 'scoped memory for feature_adapter.1']
    #allocation4 [shape = 's32[2]{0}', space=sflag, size = 0x8, scoped, tag = 'scoped memory for feature_adapter.1']
    #allocation5 [shape = 'u8[65536]{0}', space=vmem, size = 0x10000, scoped, tag = 'output window, operand 0']
    %9 = vsyncpa [#allocation3], 0
    %s10 = scalar_lea.sflag [#allocation3], 1
    %11 = vsyncpa %s10, 0
    %12 = vsyncpa [#allocation4], 0
    %s13 = scalar_lea.sflag [#allocation4], 1
    %14 = vsyncpa %s13, 0
    loop: start=0, step=1, limit=4
    $region2: #{feature_adapter.1} parent=1 // loop_pre_header
      _
    $region3: #{feature_adapter.1} parent=1 // loop_header
      %s16 = sphi 0, %s20
      %p17 = scmp.ge.s32.totalorder %s16, 4
      %s23 = sphi 0, %s35
      %s24 = sphi 0, %s31
      %s25 = sphi 0, %s23
      %s26 = sphi 0, %s24
      %s27 = sphi 0, %s25
      %s28 = sphi 0, %s26
      %s40 = sphi 0, %s42
      %s43 = sphi 0, %s40
      %s44 = sphi 0, %s43
      %s60 = sphi 0, %s44
      %s64 = sphi 0, %s64
      %s66 = sphi 0, %s64
      %s67 = sphi 0, %s66
      %s81 = sphi 0, %s67
      %s85 = sphi 0, %s85
      %s87 = sphi 0, %s85
      %s88 = sphi 0, %s87
      %s102 = sphi 0, %s88
      %s106 = sphi 0, %s106
      %s108 = sphi 0, %s106
      %s109 = sphi 0, %s108
      %s123 = sphi 0, %s109
      %s131 = sphi 0, %s133
      %s134 = sphi 0, %s131
      %s135 = sphi 0, %s134
      %s151 = sphi 0, %s135
    $region4: #{feature_adapter.1} parent=1 // loop_header_branch
      %19 = sbr.rel (%p17) target = $region8
    $region5: #{feature_adapter.1} parent=1 // loop_body
      %s21 = ssub.s32 %s16, 1
      %s22 = ssub.s32 %s16, 2
      %s29 = sadd.s32 1, %s24
      %p30 = scmp.ge.s32.totalorder %s29, 1
      %s31 = scalar_select %p30, 0, %s29
      %s32 = sadd.s32 1, %s23
      %s33 = scalar_select %p30, %s32, %s23
      %p34 = scmp.ge.s32.totalorder %s33, 2
      %s35 = scalar_select %p34, 0, %s33
      %s36 = ssub.s32 %s23, %s35
      %s37 = ssub.s32 %s24, %s31
      %s38 = sor.u32 %s36, %s37
      %p39 = scmp.eq.s32.totalorder %s38, 0
      %s41 = sadd.s32 %s40, 1
      %s42 = scalar_select %p39, %s40, %s41
      %p45 = pneg %p39
      %p46 = scmp.eq.s32.totalorder %s16, 1
      %p47 = por %p45, %p46
      %p48 = scmp.ne.s32.totalorder %s40, %s43
      %p49 = scmp.eq.s32.totalorder %s16, 0
      %p50 = por %p48, %p49
      %p51 = scmp.ne.s32.totalorder %s40, %s43
      %p52 = scmp.eq.s32.totalorder %s21, 1
      %p53 = por %p51, %p52
      %p54 = scmp.ne.s32.totalorder %s43, %s44
      %p55 = scmp.eq.s32.totalorder %s21, 0
      %p56 = por %p54, %p55
      %p57 = scmp.ne.s32.totalorder %s43, %s44
      %p58 = scmp.eq.s32.totalorder %s22, 1
      %p59 = por %p57, %p58
      %p61 = scmp.ne.s32.totalorder %s44, %s60
      %p62 = scmp.eq.s32.totalorder %s22, 0
      %p63 = por %p61, %p62
      %s65 = sadd.s32 %s64, 1
      %p68 = scmp.eq.s32.totalorder %s16, 1
      %p69 = scmp.ne.s32.totalorder %s64, %s66
      %p70 = scmp.eq.s32.totalorder %s16, 0
      %p71 = por %p69, %p70
      %p72 = scmp.ne.s32.totalorder %s64, %s66
      %p73 = scmp.eq.s32.totalorder %s21, 1
      %p74 = por %p72, %p73
      %p75 = scmp.ne.s32.totalorder %s66, %s67
      %p76 = scmp.eq.s32.totalorder %s21, 0
      %p77 = por %p75, %p76
      %p78 = scmp.ne.s32.totalorder %s66, %s67
      %p79 = scmp.eq.s32.totalorder %s22, 1
      %p80 = por %p78, %p79
      %p82 = scmp.ne.s32.totalorder %s67, %s81
      %p83 = scmp.eq.s32.totalorder %s22, 0
      %p84 = por %p82, %p83
      %s86 = sadd.s32 %s85, 1
      %p89 = scmp.eq.s32.totalorder %s16, 1
      %p90 = scmp.ne.s32.totalorder %s85, %s87
      %p91 = scmp.eq.s32.totalorder %s16, 0
      %p92 = por %p90, %p91
      %p93 = scmp.ne.s32.totalorder %s85, %s87
      %p94 = scmp.eq.s32.totalorder %s21, 1
      %p95 = por %p93, %p94
      %p96 = scmp.ne.s32.totalorder %s87, %s88
      %p97 = scmp.eq.s32.totalorder %s21, 0
      %p98 = por %p96, %p97
      %p99 = scmp.ne.s32.totalorder %s87, %s88
      %p100 = scmp.eq.s32.totalorder %s22, 1
      %p101 = por %p99, %p100
      %p103 = scmp.ne.s32.totalorder %s88, %s102
      %p104 = scmp.eq.s32.totalorder %s22, 0
      %p105 = por %p103, %p104
      %s107 = sadd.s32 %s106, 1
      %p110 = scmp.eq.s32.totalorder %s16, 1
      %p111 = scmp.ne.s32.totalorder %s106, %s108
      %p112 = scmp.eq.s32.totalorder %s16, 0
      %p113 = por %p111, %p112
      %p114 = scmp.ne.s32.totalorder %s106, %s108
      %p115 = scmp.eq.s32.totalorder %s21, 1
      %p116 = por %p114, %p115
      %p117 = scmp.ne.s32.totalorder %s108, %s109
      %p118 = scmp.eq.s32.totalorder %s21, 0
      %p119 = por %p117, %p118
      %p120 = scmp.ne.s32.totalorder %s108, %s109
      %p121 = scmp.eq.s32.totalorder %s22, 1
      %p122 = por %p120, %p121
      %p124 = scmp.ne.s32.totalorder %s109, %s123
      %p125 = scmp.eq.s32.totalorder %s22, 0
      %p126 = por %p124, %p125
      %s127 = ssub.s32 %s23, %s35
      %s128 = ssub.s32 %s24, %s31
      %s129 = sor.u32 %s127, %s128
      %p130 = scmp.eq.s32.totalorder %s129, 0
      %s132 = sadd.s32 %s131, 1
      %s133 = scalar_select %p130, %s131, %s132
      %p136 = pneg %p130
      %p137 = scmp.eq.s32.totalorder %s16, 1
      %p138 = por %p136, %p137
      %p139 = scmp.ne.s32.totalorder %s131, %s134
      %p140 = scmp.eq.s32.totalorder %s16, 0
      %p141 = por %p139, %p140
      %p142 = scmp.ne.s32.totalorder %s131, %s134
      %p143 = scmp.eq.s32.totalorder %s21, 1
      %p144 = por %p142, %p143
      %p145 = scmp.ne.s32.totalorder %s134, %s135
      %p146 = scmp.eq.s32.totalorder %s21, 0
      %p147 = por %p145, %p146
      %p148 = scmp.ne.s32.totalorder %s134, %s135
      %p149 = scmp.eq.s32.totalorder %s22, 1
      %p150 = por %p148, %p149
      %p152 = scmp.ne.s32.totalorder %s135, %s151
      %p153 = scmp.eq.s32.totalorder %s22, 0
      %p154 = por %p152, %p153
      %p155 = scmp.le.s32.totalorder 1, %s16
      %p156 = scmp.lt.s32.totalorder %s16, 3
      %p157 = pnand %p155, %p156
      %p158 = pneg %p157
      // Predicated region
      $region9: #{feature_adapter.1} parent=5 // pred_check
        _
      $region10: #{feature_adapter.1} parent=5 // pred_check_branch
        %160 = sbr.rel (%p157) target = $region12
      $region11: #{feature_adapter.1} parent=5 // pred_region
        %s161 = ssub.s32 %s16, 1
        // Predicated region
        $region13: #{feature_adapter.1} parent=11 // pred_check
          %p162 = pneg %p77
        $region14: #{feature_adapter.1} parent=11 // pred_check_branch
          %164 = sbr.rel (%p162) target = $region16
        $region15: #{feature_adapter.1} parent=11 // pred_region
          _
        $region16: #{feature_adapter.1} parent=11 // pred_fallthru
          _
        // Predicated region
        $region17: #{feature_adapter.1} parent=11 // pred_check
          %p165 = pneg %p98
        $region18: #{feature_adapter.1} parent=11 // pred_check_branch
          %167 = sbr.rel (%p165) target = $region20
        $region19: #{feature_adapter.1} parent=11 // pred_region
          _
        $region20: #{feature_adapter.1} parent=11 // pred_fallthru
          _
        // Predicated region
        $region21: #{feature_adapter.1} parent=11 // pred_check
          %p168 = pneg %p119
        $region22: #{feature_adapter.1} parent=11 // pred_check_branch
          %170 = sbr.rel (%p168) target = $region24
        $region23: #{feature_adapter.1} parent=11 // pred_region
          _
        $region24: #{feature_adapter.1} parent=11 // pred_fallthru
          _
      $region12: #{feature_adapter.1} parent=5 // pred_fallthru
        _
      %p171 = scmp.lt.s32.totalorder %s16, 2
      // Predicated region
      $region25: #{feature_adapter.1} parent=5 // pred_check
        %p172 = pneg %p171
      $region26: #{feature_adapter.1} parent=5 // pred_check_branch
        %174 = sbr.rel (%p172) target = $region28
      $region27: #{feature_adapter.1} parent=5 // pred_region
        // Predicated region
        $region29: #{feature_adapter.1} parent=27 // pred_check
          %p175 = pneg %p50
        $region30: #{feature_adapter.1} parent=27 // pred_check_branch
          %177 = sbr.rel (%p175) target = $region32
        $region31: #{feature_adapter.1} parent=27 // pred_region
          %s178 = sand.u32 %s40, 1
          %s179 = scalar_lea.sflag [#allocation3], %s178
          %s180 = sand.u32 %s40, 1
          %s181 = smul.addr %s180, 64
          %s182 = scalar_lea.vmem [#allocation2], %s181
          %s183 = smul.u32 2, %s24
          %s185 = ssub.s32 1024, 1024
          %186 = vsyncadd %s179, %s185
          %s187 = smul.addr %s23, 8
          %s188 = sadd.s32 %s183, %s187
          %s189 = smul.addr %s188, 128
          %s190 = scalar_lea.hbm %s0, %s189
          %s191 = sshll.u32 %s182, 4
          %s192 = int_to_ptr.vmem [resolvable:$true] %s191
          %197 = dma.hbm_to_vmem [thread:$0]  %s190, 1024, %s192, %s179, 256, 256, 16
        $region32: #{feature_adapter.1} parent=27 // pred_fallthru
          _
      $region28: #{feature_adapter.1} parent=5 // pred_fallthru
        _
      %p198 = scmp.le.s32.totalorder 1, %s16
      %p199 = scmp.lt.s32.totalorder %s16, 3
      %p200 = pnand %p198, %p199
      %p201 = pneg %p200
      // Predicated region
      $region33: #{feature_adapter.1} parent=5 // pred_check
        _
      $region34: #{feature_adapter.1} parent=5 // pred_check_branch
        %203 = sbr.rel (%p200) target = $region36
      $region35: #{feature_adapter.1} parent=5 // pred_region
        %s204 = ssub.s32 %s16, 1
        %s205 = sand.u32 %s43, 1
        %s206 = scalar_lea.sflag [#allocation3], %s205
        %s207 = sand.u32 %s43, 1
        %s208 = smul.addr %s207, 64
        %s209 = scalar_lea.vmem [#allocation2], %s208
        // Predicated region
        $region37: #{feature_adapter.1} parent=35 // pred_check
          %p210 = pneg %p56
        $region38: #{feature_adapter.1} parent=35 // pred_check_branch
          %212 = sbr.rel (%p210) target = $region40
        $region39: #{feature_adapter.1} parent=35 // pred_region
          %213 = dma.done %s206, 1024
        $region40: #{feature_adapter.1} parent=35 // pred_fallthru
          _
        %s214 = sand.u32 %s43, 1
        %s215 = scalar_lea.sflag [#allocation3], %s214
        %s216 = sand.u32 %s43, 1
        %s217 = smul.addr %s216, 64
        %s218 = scalar_lea.vmem [#allocation2], %s217
        %p219 = pneg %p56
        %p220 = pneg %p53
        %p221 = pneg %p77
        %p222 = pneg %p74
        %p223 = pneg %p98
        %p224 = pneg %p95
        %p225 = pneg %p119
        %p226 = pneg %p116
        %p227 = pneg %p147
        %p228 = pneg %p144
        %s229 = sand.u32 %s134, 1
        %s230 = scalar_lea.sflag [#allocation4], %s229
        %s231 = sand.u32 %s134, 1
        %s232 = smul.addr %s231, 64
        %s233 = scalar_lea.vmem [#allocation5], %s232
        %s234 = smul.u32 2, %s26
        %s235 = smul.u32 2, %s26
        %v236 = vld [vmem:[%s209] sm:$0xff]
        %v237 = vld [vmem:[%s209 + $0x8] sm:$0xff]
        %v238 = vld [vmem:[%s209 + $0x10] sm:$0xff]
        %v239 = vld [vmem:[%s209 + $0x18] sm:$0xff]
        %v240 = vld [vmem:[%s209 + $0x20] sm:$0xff]
        %v241 = vld [vmem:[%s209 + $0x28] sm:$0xff]
        %v242 = vld [vmem:[%s209 + $0x30] sm:$0xff]
        %v243 = vld [vmem:[%s209 + $0x38] sm:$0xff]
        %v244 = vld [vmem:[%s1] sm:$0xff]
        %v245 = vld [vmem:[%s1 + $0x8] sm:$0xff]
        %v246 = vld [vmem:[%s1 + $0x10] sm:$0xff]
        %v247 = vld [vmem:[%s1 + $0x18] sm:$0xff]
        %v248 = vld [vmem:[%s1 + $0x20] sm:$0xff]
        %v249 = vld [vmem:[%s1 + $0x28] sm:$0xff]
        %v250 = vld [vmem:[%s1 + $0x30] sm:$0xff]
        %v251 = vld [vmem:[%s1 + $0x38] sm:$0xff]
        %vm252 = vcmask 261120
        %v254 = vsel %vm252, %v244, 0
        %v257 = vsel %vm252, %v245, 0
        %v260 = vsel %vm252, %v246, 0
        %v263 = vsel %vm252, %v247, 0
        %v266 = vsel %vm252, %v248, 0
        %v269 = vsel %vm252, %v249, 0
        %v272 = vsel %vm252, %v250, 0
        %v275 = vsel %vm252, %v251, 0
        %277 = vmatprep.subr.mxu0 %v237
        %278 = vmatpush1.msra.mxu0 %v236
        %279 = vmatprep.subr.mxu0 %v239
        %280 = vmatpush1.msra.mxu0 %v238
        %281 = vmatprep.subr.mxu0 %v241
        %282 = vmatpush1.msra.mxu0 %v240
        %283 = vmatprep.subr.mxu0 %v243
        %284 = vmatpush1.msra.mxu0 %v242
        %285 = vmatprep.subr.mxu0 0.0
        %286 = vmatpush1.msra.mxu0 0.0
        %287 = vmatprep.subr.mxu0 0.0
        %288 = vmatpush1.msra.mxu0 0.0
        %289 = vmatprep.subr.mxu0 0.0
        %290 = vmatpush1.msra.mxu0 0.0
        %291 = vmatprep.subr.mxu0 0.0
        %292 = vmatpush1.msra.mxu0 0.0
        %293 = vmatprep.subr.mxu0 0.0
        %294 = vmatpush1.msra.mxu0 0.0
        %295 = vmatprep.subr.mxu0 0.0
        %296 = vmatpush1.msra.mxu0 0.0
        %297 = vmatprep.subr.mxu0 0.0
        %298 = vmatpush1.msra.mxu0 0.0
        %299 = vmatprep.subr.mxu0 0.0
        %300 = vmatpush1.msra.mxu0 0.0
        %301 = vmatprep.subr.mxu0 0.0
        %302 = vmatpush1.msra.mxu0 0.0
        %303 = vmatprep.subr.mxu0 0.0
        %304 = vmatpush1.msra.mxu0 0.0
        %305 = vmatprep.subr.mxu0 0.0
        %306 = vmatpush1.msra.mxu0 0.0
        %307 = vmatprep.subr.mxu0 0.0
        %308 = vmatpush1.msra.mxu0 0.0
        %309 = vmatprep.subr.mxu0 0.0
        %310 = vmatpush1.msra.mxu0 0.0
        %311 = vmatprep.subr.mxu0 0.0
        %312 = vmatpush1.msra.mxu0 0.0
        %313 = vmatprep.subr.mxu0 0.0
        %314 = vmatpush1.msra.mxu0 0.0
        %315 = vmatprep.subr.mxu0 0.0
        %316 = vmatpush1.msra.mxu0 0.0
        %317 = vmatprep.subr.mxu0 0.0
        %318 = vmatpush1.msra.mxu0 0.0
        %319 = vmatprep.subr.mxu0 0.0
        %320 = vmatpush1.msra.mxu0 0.0
        %321 = vmatprep.subr.mxu0 0.0
        %322 = vmatpush1.msra.mxu0 0.0
        %323 = vmatprep.subr.mxu0 0.0
        %324 = vmatpush1.msra.mxu0 0.0
        %325 = vmatprep.subr.mxu0 0.0
        %326 = vmatpush1.msra.mxu0 0.0
        %327 = vmatprep.subr.mxu0 0.0
        %328 = vmatpush1.msra.mxu0 0.0
        %329 = vmatprep.subr.mxu0 0.0
        %330 = vmatpush1.msra.mxu0 0.0
        %331 = vmatprep.subr.mxu0 0.0
        %332 = vmatpush1.msra.mxu0 0.0
        %333 = vmatprep.subr.mxu0 0.0
        %334 = vmatpush1.msra.mxu0 0.0
        %335 = vmatprep.subr.mxu0 0.0
        %336 = vmatpush1.msra.mxu0 0.0
        %337 = vmatprep.subr.mxu0 0.0
        %338 = vmatpush1.msra.mxu0 0.0
        %339 = vmatprep.subr.mxu0 0.0
        %340 = vmatpush1.msra.mxu0 0.0
        %341 = vmatprep.mubr.f32.mxu0 0.0
        %342 = vmatmul.mubr.f32.gmra.mrb[0].mxu0 %v254
        %v343 = vpop.f32.mrb[0].mxu0
        %v344 = vadd.f32 0.0, %v343
        %v345 = vpop.f32.mrb[0].mxu0
        %v346 = vadd.f32 0.0, %v345
        %347 = vmatprep.mubr.f32.mxu0 0.0
        %348 = vmatmul.mubr.f32.gmra.mrb[0].mxu0 %v257
        %v349 = vpop.f32.mrb[0].mxu0
        %v350 = vadd.f32 0.0, %v349
        %v351 = vpop.f32.mrb[0].mxu0
        %v352 = vadd.f32 0.0, %v351
        %353 = vmatprep.mubr.f32.mxu0 0.0
        %354 = vmatmul.mubr.f32.gmra.mrb[0].mxu0 %v260
        %v355 = vpop.f32.mrb[0].mxu0
        %v356 = vadd.f32 0.0, %v355
        %v357 = vpop.f32.mrb[0].mxu0
        %v358 = vadd.f32 0.0, %v357
        %359 = vmatprep.mubr.f32.mxu0 0.0
        %360 = vmatmul.mubr.f32.gmra.mrb[0].mxu0 %v263
        %v361 = vpop.f32.mrb[0].mxu0
        %v362 = vadd.f32 0.0, %v361
        %v363 = vpop.f32.mrb[0].mxu0
        %v364 = vadd.f32 0.0, %v363
        %365 = vmatprep.mubr.f32.mxu0 0.0
        %366 = vmatmul.mubr.f32.gmra.mrb[0].mxu0 %v266
        %v367 = vpop.f32.mrb[0].mxu0
        %v368 = vadd.f32 0.0, %v367
        %v369 = vpop.f32.mrb[0].mxu0
        %v370 = vadd.f32 0.0, %v369
        %371 = vmatprep.mubr.f32.mxu0 0.0
        %372 = vmatmul.mubr.f32.gmra.mrb[0].mxu0 %v269
        %v373 = vpop.f32.mrb[0].mxu0
        %v374 = vadd.f32 0.0, %v373
        %v375 = vpop.f32.mrb[0].mxu0
        %v376 = vadd.f32 0.0, %v375
        %377 = vmatprep.mubr.f32.mxu0 0.0
        %378 = vmatmul.mubr.f32.gmra.mrb[0].mxu0 %v272
        %v379 = vpop.f32.mrb[0].mxu0
        %v380 = vadd.f32 0.0, %v379
        %v381 = vpop.f32.mrb[0].mxu0
        %v382 = vadd.f32 0.0, %v381
        %383 = vmatprep.mubr.f32.mxu0 0.0
        %384 = vmatmul.mubr.f32.gmra.mrb[0].mxu0 %v275
        %v385 = vpop.f32.mrb[0].mxu0
        %v386 = vadd.f32 0.0, %v385
        %v387 = vpop.f32.mrb[0].mxu0
        %v388 = vadd.f32 0.0, %v387
        %389 = vdwg.mxu0
        %v390 = vmax.f32 %v344, 0.0
        %v391 = vmax.f32 %v346, 0.0
        %v392 = vmax.f32 %v350, 0.0
        %v393 = vmax.f32 %v352, 0.0
        %v394 = vmax.f32 %v356, 0.0
        %v395 = vmax.f32 %v358, 0.0
        %v396 = vmax.f32 %v362, 0.0
        %v397 = vmax.f32 %v364, 0.0
        %v398 = vmax.f32 %v368, 0.0
        %v399 = vmax.f32 %v370, 0.0
        %v400 = vmax.f32 %v374, 0.0
        %v401 = vmax.f32 %v376, 0.0
        %v402 = vmax.f32 %v380, 0.0
        %v403 = vmax.f32 %v382, 0.0
        %v404 = vmax.f32 %v386, 0.0
        %v405 = vmax.f32 %v388, 0.0
        %v406 = vld [vmem:[%s2] sm:$0xff]
        %v407 = vld [vmem:[%s2 + $0x8] sm:$0xff]
        %v408 = vld [vmem:[%s2 + $0x10] sm:$0xff]
        %v409 = vld [vmem:[%s2 + $0x18] sm:$0xff]
        %v410 = vld [vmem:[%s2 + $0x20] sm:$0xff]
        %v411 = vld [vmem:[%s2 + $0x28] sm:$0xff]
        %v412 = vld [vmem:[%s2 + $0x30] sm:$0xff]
        %v413 = vld [vmem:[%s2 + $0x38] sm:$0xff]
        %vm414 = vcmask 523264
        %v416 = vsel %vm414, %v406, 0
        %v419 = vsel %vm414, %v407, 0
        %v422 = vsel %vm414, %v408, 0
        %v425 = vsel %vm414, %v409, 0
        %v428 = vsel %vm414, %v410, 0
        %v431 = vsel %vm414, %v411, 0
        %v434 = vsel %vm414, %v412, 0
        %v437 = vsel %vm414, %v413, 0
        %439 = vmatprep.subr.mxu0 %v391
        %440 = vmatpush1.msra.mxu0 %v390
        %441 = vmatprep.subr.mxu0 %v393
        %442 = vmatpush1.msra.mxu0 %v392
        %443 = vmatprep.subr.mxu0 %v395
        %444 = vmatpush1.msra.mxu0 %v394
        %445 = vmatprep.subr.mxu0 %v397
        %446 = vmatpush1.msra.mxu0 %v396
        %447 = vmatprep.subr.mxu0 %v399
        %448 = vmatpush1.msra.mxu0 %v398
        %449 = vmatprep.subr.mxu0 %v401
        %450 = vmatpush1.msra.mxu0 %v400
        %451 = vmatprep.subr.mxu0 %v403
        %452 = vmatpush1.msra.mxu0 %v402
        %453 = vmatprep.subr.mxu0 %v405
        %454 = vmatpush1.msra.mxu0 %v404
        %455 = vmatprep.subr.mxu0 0.0
        %456 = vmatpush1.msra.mxu0 0.0
        %457 = vmatprep.subr.mxu0 0.0
        %458 = vmatpush1.msra.mxu0 0.0
        %459 = vmatprep.subr.mxu0 0.0
        %460 = vmatpush1.msra.mxu0 0.0
        %461 = vmatprep.subr.mxu0 0.0
        %462 = vmatpush1.msra.mxu0 0.0
        %463 = vmatprep.subr.mxu0 0.0
        %464 = vmatpush1.msra.mxu0 0.0
        %465 = vmatprep.subr.mxu0 0.0
        %466 = vmatpush1.msra.mxu0 0.0
        %467 = vmatprep.subr.mxu0 0.0
        %468 = vmatpush1.msra.mxu0 0.0
        %469 = vmatprep.subr.mxu0 0.0
        %470 = vmatpush1.msra.mxu0 0.0
        %471 = vmatprep.subr.mxu0 0.0
        %472 = vmatpush1.msra.mxu0 0.0
        %473 = vmatprep.subr.mxu0 0.0
        %474 = vmatpush1.msra.mxu0 0.0
        %475 = vmatprep.subr.mxu0 0.0
        %476 = vmatpush1.msra.mxu0 0.0
        %477 = vmatprep.subr.mxu0 0.0
        %478 = vmatpush1.msra.mxu0 0.0
        %479 = vmatprep.subr.mxu0 0.0
        %480 = vmatpush1.msra.mxu0 0.0
        %481 = vmatprep.subr.mxu0 0.0
        %482 = vmatpush1.msra.mxu0 0.0
        %483 = vmatprep.subr.mxu0 0.0
        %484 = vmatpush1.msra.mxu0 0.0
        %485 = vmatprep.subr.mxu0 0.0
        %486 = vmatpush1.msra.mxu0 0.0
        %487 = vmatprep.subr.mxu0 0.0
        %488 = vmatpush1.msra.mxu0 0.0
        %489 = vmatprep.subr.mxu0 0.0
        %490 = vmatpush1.msra.mxu0 0.0
        %491 = vmatprep.subr.mxu0 0.0
        %492 = vmatpush1.msra.mxu0 0.0
        %493 = vmatprep.subr.mxu0 0.0
        %494 = vmatpush1.msra.mxu0 0.0
        %495 = vmatprep.subr.mxu0 0.0
        %496 = vmatpush1.msra.mxu0 0.0
        %497 = vmatprep.subr.mxu0 0.0
        %498 = vmatpush1.msra.mxu0 0.0
        %499 = vmatprep.subr.mxu0 0.0
        %500 = vmatpush1.msra.mxu0 0.0
        %501 = vmatprep.subr.mxu0 0.0
        %502 = vmatpush1.msra.mxu0 0.0
        %503 = vmatprep.mubr.f32.mxu0 0.0
        %504 = vmatmul.mubr.f32.gmra.mrb[0].mxu0 %v416
        %v505 = vpop.f32.mrb[0].mxu0
        %v506 = vadd.f32 0.0, %v505
        %v507 = vpop.f32.mrb[0].mxu0
        %v508 = vadd.f32 0.0, %v507
        %509 = vmatprep.mubr.f32.mxu0 0.0
        %510 = vmatmul.mubr.f32.gmra.mrb[0].mxu0 %v419
        %v511 = vpop.f32.mrb[0].mxu0
        %v512 = vadd.f32 0.0, %v511
        %v513 = vpop.f32.mrb[0].mxu0
        %v514 = vadd.f32 0.0, %v513
        %515 = vmatprep.mubr.f32.mxu0 0.0
        %516 = vmatmul.mubr.f32.gmra.mrb[0].mxu0 %v422
        %v517 = vpop.f32.mrb[0].mxu0
        %v518 = vadd.f32 0.0, %v517
        %v519 = vpop.f32.mrb[0].mxu0
        %v520 = vadd.f32 0.0, %v519
        %521 = vmatprep.mubr.f32.mxu0 0.0
        %522 = vmatmul.mubr.f32.gmra.mrb[0].mxu0 %v425
        %v523 = vpop.f32.mrb[0].mxu0
        %v524 = vadd.f32 0.0, %v523
        %v525 = vpop.f32.mrb[0].mxu0
        %v526 = vadd.f32 0.0, %v525
        %527 = vmatprep.mubr.f32.mxu0 0.0
        %528 = vmatmul.mubr.f32.gmra.mrb[0].mxu0 %v428
        %v529 = vpop.f32.mrb[0].mxu0
        %v530 = vadd.f32 0.0, %v529
        %v531 = vpop.f32.mrb[0].mxu0
        %v532 = vadd.f32 0.0, %v531
        %533 = vmatprep.mubr.f32.mxu0 0.0
        %534 = vmatmul.mubr.f32.gmra.mrb[0].mxu0 %v431
        %v535 = vpop.f32.mrb[0].mxu0
        %v536 = vadd.f32 0.0, %v535
        %v537 = vpop.f32.mrb[0].mxu0
        %v538 = vadd.f32 0.0, %v537
        %539 = vmatprep.mubr.f32.mxu0 0.0
        %540 = vmatmul.mubr.f32.gmra.mrb[0].mxu0 %v434
        %v541 = vpop.f32.mrb[0].mxu0
        %v542 = vadd.f32 0.0, %v541
        %v543 = vpop.f32.mrb[0].mxu0
        %v544 = vadd.f32 0.0, %v543
        %545 = vmatprep.mubr.f32.mxu0 0.0
        %546 = vmatmul.mubr.f32.gmra.mrb[0].mxu0 %v437
        %v547 = vpop.f32.mrb[0].mxu0
        %v548 = vadd.f32 0.0, %v547
        %v549 = vpop.f32.mrb[0].mxu0
        %v550 = vadd.f32 0.0, %v549
        %551 = vdwg.mxu0
        %v552 = vmax.f32 %v506, 0.0
        %v553 = vmax.f32 %v508, 0.0
        %v554 = vmax.f32 %v512, 0.0
        %v555 = vmax.f32 %v514, 0.0
        %v556 = vmax.f32 %v518, 0.0
        %v557 = vmax.f32 %v520, 0.0
        %v558 = vmax.f32 %v524, 0.0
        %v559 = vmax.f32 %v526, 0.0
        %v560 = vmax.f32 %v530, 0.0
        %v561 = vmax.f32 %v532, 0.0
        %v562 = vmax.f32 %v536, 0.0
        %v563 = vmax.f32 %v538, 0.0
        %v564 = vmax.f32 %v542, 0.0
        %v565 = vmax.f32 %v544, 0.0
        %v566 = vmax.f32 %v548, 0.0
        %v567 = vmax.f32 %v550, 0.0
        %v568 = vld [vmem:[%s3] sm:$0xff]
        %v569 = vld [vmem:[%s3 + $0x8] sm:$0xff]
        %v570 = vld [vmem:[%s3 + $0x10] sm:$0xff]
        %v571 = vld [vmem:[%s3 + $0x18] sm:$0xff]
        %v573 = vsel %vm414, %v568, 0
        %v576 = vsel %vm414, %v569, 0
        %v579 = vsel %vm414, %v570, 0
        %v582 = vsel %vm414, %v571, 0
        %584 = vmatprep.subr.mxu0 %v553
        %585 = vmatpush1.msra.mxu0 %v552
        %586 = vmatprep.subr.mxu0 %v555
        %587 = vmatpush1.msra.mxu0 %v554
        %588 = vmatprep.subr.mxu0 %v557
        %589 = vmatpush1.msra.mxu0 %v556
        %590 = vmatprep.subr.mxu0 %v559
        %591 = vmatpush1.msra.mxu0 %v558
        %592 = vmatprep.subr.mxu0 %v561
        %593 = vmatpush1.msra.mxu0 %v560
        %594 = vmatprep.subr.mxu0 %v563
        %595 = vmatpush1.msra.mxu0 %v562
        %596 = vmatprep.subr.mxu0 %v565
        %597 = vmatpush1.msra.mxu0 %v564
        %598 = vmatprep.subr.mxu0 %v567
        %599 = vmatpush1.msra.mxu0 %v566
        %600 = vmatprep.subr.mxu0 0.0
        %601 = vmatpush1.msra.mxu0 0.0
        %602 = vmatprep.subr.mxu0 0.0
        %603 = vmatpush1.msra.mxu0 0.0
        %604 = vmatprep.subr.mxu0 0.0
        %605 = vmatpush1.msra.mxu0 0.0
        %606 = vmatprep.subr.mxu0 0.0
        %607 = vmatpush1.msra.mxu0 0.0
        %608 = vmatprep.subr.mxu0 0.0
        %609 = vmatpush1.msra.mxu0 0.0
        %610 = vmatprep.subr.mxu0 0.0
        %611 = vmatpush1.msra.mxu0 0.0
        %612 = vmatprep.subr.mxu0 0.0
        %613 = vmatpush1.msra.mxu0 0.0
        %614 = vmatprep.subr.mxu0 0.0
        %615 = vmatpush1.msra.mxu0 0.0
        %616 = vmatprep.subr.mxu0 0.0
        %617 = vmatpush1.msra.mxu0 0.0
        %618 = vmatprep.subr.mxu0 0.0
        %619 = vmatpush1.msra.mxu0 0.0
        %620 = vmatprep.subr.mxu0 0.0
        %621 = vmatpush1.msra.mxu0 0.0
        %622 = vmatprep.subr.mxu0 0.0
        %623 = vmatpush1.msra.mxu0 0.0
        %624 = vmatprep.subr.mxu0 0.0
        %625 = vmatpush1.msra.mxu0 0.0
        %626 = vmatprep.subr.mxu0 0.0
        %627 = vmatpush1.msra.mxu0 0.0
        %628 = vmatprep.subr.mxu0 0.0
        %629 = vmatpush1.msra.mxu0 0.0
        %630 = vmatprep.subr.mxu0 0.0
        %631 = vmatpush1.msra.mxu0 0.0
        %632 = vmatprep.subr.mxu0 0.0
        %633 = vmatpush1.msra.mxu0 0.0
        %634 = vmatprep.subr.mxu0 0.0
        %635 = vmatpush1.msra.mxu0 0.0
        %636 = vmatprep.subr.mxu0 0.0
        %637 = vmatpush1.msra.mxu0 0.0
        %638 = vmatprep.subr.mxu0 0.0
        %639 = vmatpush1.msra.mxu0 0.0
        %640 = vmatprep.subr.mxu0 0.0
        %641 = vmatpush1.msra.mxu0 0.0
        %642 = vmatprep.subr.mxu0 0.0
        %643 = vmatpush1.msra.mxu0 0.0
        %644 = vmatprep.subr.mxu0 0.0
        %645 = vmatpush1.msra.mxu0 0.0
        %646 = vmatprep.subr.mxu0 0.0
        %647 = vmatpush1.msra.mxu0 0.0
        %648 = vmatprep.mubr.f32.mxu0 0.0
        %649 = vmatmul.mubr.f32.gmra.mrb[0].mxu0 %v573
        %v650 = vpop.f32.mrb[0].mxu0
        %v651 = vadd.f32 0.0, %v650
        %v652 = vpop.f32.mrb[0].mxu0
        %v653 = vadd.f32 0.0, %v652
        %654 = vmatprep.mubr.f32.mxu0 0.0
        %655 = vmatmul.mubr.f32.gmra.mrb[0].mxu0 %v576
        %v656 = vpop.f32.mrb[0].mxu0
        %v657 = vadd.f32 0.0, %v656
        %v658 = vpop.f32.mrb[0].mxu0
        %v659 = vadd.f32 0.0, %v658
        %660 = vmatprep.mubr.f32.mxu0 0.0
        %661 = vmatmul.mubr.f32.gmra.mrb[0].mxu0 %v579
        %v662 = vpop.f32.mrb[0].mxu0
        %v663 = vadd.f32 0.0, %v662
        %v664 = vpop.f32.mrb[0].mxu0
        %v665 = vadd.f32 0.0, %v664
        %666 = vmatprep.mubr.f32.mxu0 0.0
        %667 = vmatmul.mubr.f32.gmra.mrb[0].mxu0 %v582
        %v668 = vpop.f32.mrb[0].mxu0
        %v669 = vadd.f32 0.0, %v668
        %v670 = vpop.f32.mrb[0].mxu0
        %v671 = vadd.f32 0.0, %v670
        %672 = vdwg.mxu0
        %v673 = vmax.f32 %v651, 0.0
        %v674 = vmax.f32 %v653, 0.0
        %v675 = vmax.f32 %v657, 0.0
        %v676 = vmax.f32 %v659, 0.0
        %v677 = vmax.f32 %v663, 0.0
        %v678 = vmax.f32 %v665, 0.0
        %v679 = vmax.f32 %v669, 0.0
        %v680 = vmax.f32 %v671, 0.0
        %v681 = vadd.f32 %v673, %v236
        %v682 = vadd.f32 %v674, %v237
        %v683 = vadd.f32 %v675, %v238
        %v684 = vadd.f32 %v676, %v239
        %v685 = vadd.f32 %v677, %v240
        %v686 = vadd.f32 %v678, %v241
        %v687 = vadd.f32 %v679, %v242
        %v688 = vadd.f32 %v680, %v243
        %689 = vst [vmem:[%s233] sm:$0xff] %v681
        %690 = vst [vmem:[%s233 + $0x8] sm:$0xff] %v682
        %691 = vst [vmem:[%s233 + $0x10] sm:$0xff] %v683
        %692 = vst [vmem:[%s233 + $0x18] sm:$0xff] %v684
        %693 = vst [vmem:[%s233 + $0x20] sm:$0xff] %v685
        %694 = vst [vmem:[%s233 + $0x28] sm:$0xff] %v686
        %695 = vst [vmem:[%s233 + $0x30] sm:$0xff] %v687
        %696 = vst [vmem:[%s233 + $0x38] sm:$0xff] %v688
        %s697 = sand.u32 %s134, 1
        %s698 = scalar_lea.sflag [#allocation4], %s697
        %s699 = sand.u32 %s134, 1
        %s700 = smul.addr %s699, 64
        %s701 = scalar_lea.vmem [#allocation5], %s700
        // Predicated region
        $region41: #{feature_adapter.1} parent=35 // pred_check
          %p702 = pneg %p144
        $region42: #{feature_adapter.1} parent=35 // pred_check_branch
          %704 = sbr.rel (%p702) target = $region44
        $region43: #{feature_adapter.1} parent=35 // pred_region
          %s705 = smul.u32 2, %s26
          %s707 = ssub.s32 1024, 1024
          %708 = vsyncadd %s698, %s707
          %s709 = smul.addr %s25, 8
          %s710 = sadd.s32 %s705, %s709
          %s711 = smul.addr %s710, 128
          %s712 = scalar_lea.hbm %s4, %s711
          %s713 = sshll.u32 %s701, 4
          %s714 = int_to_ptr.vmem [resolvable:$true] %s713
          %719 = dma.vmem_to_hbm [thread:$0]  %s714, 1024, %s712, %s698, 256, 256, 16
        $region44: #{feature_adapter.1} parent=35 // pred_fallthru
          _
      $region36: #{feature_adapter.1} parent=5 // pred_fallthru
        _
      %p720 = scmp.le.s32.totalorder 2, %s16
      // Predicated region
      $region45: #{feature_adapter.1} parent=5 // pred_check
        %p721 = pneg %p720
      $region46: #{feature_adapter.1} parent=5 // pred_check_branch
        %723 = sbr.rel (%p721) target = $region48
      $region47: #{feature_adapter.1} parent=5 // pred_region
        %s724 = ssub.s32 %s16, 2
        // Predicated region
        $region49: #{feature_adapter.1} parent=47 // pred_check
          %p725 = pneg %p150
        $region50: #{feature_adapter.1} parent=47 // pred_check_branch
          %727 = sbr.rel (%p725) target = $region52
        $region51: #{feature_adapter.1} parent=47 // pred_region
          %s728 = sand.u32 %s135, 1
          %s729 = scalar_lea.sflag [#allocation4], %s728
          %s730 = sand.u32 %s135, 1
          %s731 = smul.addr %s730, 64
          %s732 = scalar_lea.vmem [#allocation5], %s731
          %733 = dma.done %s729, 1024
        $region52: #{feature_adapter.1} parent=47 // pred_fallthru
          _
      $region48: #{feature_adapter.1} parent=5 // pred_fallthru
        _
    $region6: #{feature_adapter.1} parent=1 // loop_footer
      %s20 = sadd.s32 1, %s16
    $region7: #{feature_adapter.1} parent=1 // loop_footer_branch
      %15 = sbr.rel target = $region3
    $region8: #{feature_adapter.1} parent=1 // loop_exit
      _
    %734 = vsyncpa [#allocation3], 1
    %s735 = scalar_lea.sflag [#allocation3], 1
    %736 = vsyncpa %s735, 1
    %737 = vsyncpa [#allocation4], 1
    %s738 = scalar_lea.sflag [#allocation4], 1
    %739 = vsyncpa %s738, 1

</llo_original>
